<compile_context>
chip_gen: v7x
topology: tpu7x:2x2x1
jax: 0.10.0
libtpu: 0.0.40
codegen_flags: <defaults>
</compile_context>

<pallas_src>
import functools

import numpy as np

import jax
import jax.numpy as jnp
from jax.experimental import pallas as pl
from jax.experimental.pallas import tpu as pltpu


def _vmem_block_budget_bytes():
    """Generation-aware budget for the double-buffered in+out blocks."""
    try:
        cap = pltpu.get_tpu_info().vmem_capacity_bytes
    except Exception:
        cap = 64 << 20   # conservative fallback: v7x per-core VMEM
    # ~1/8 of physical VMEM, capped well under every generation's default
    # scoped limit (16 MiB v5e, 32 MiB v6e/v7x).
    return int(min(max(cap // 8, 2 << 20), 16 << 20))


_BLOCK_BUDGET = _vmem_block_budget_bytes()


def _hoi_kernel(slab_ref, packed_ref, *, num_fg, num_verbs):
    """slab rows (sublane axis): [obj_logits (C+1) | verb_logits (V) |
       sub cxcywh (4) | obj cxcywh (4) | img_w, img_h (2)] x Qp lanes."""
    c1 = num_fg + 1
    v = num_verbs
    off_vl = c1
    off_sb = off_vl + v
    off_ob = off_sb + 4
    off_wh = off_ob + 4

    # --- object-class score / label (softmax over classes = sublane axis).
    logits = slab_ref[:, 0:c1, :]                         # (bn, C+1, Qp)
    logits_fg = logits[:, :num_fg, :]                     # (bn, C,   Qp)
    bg = logits[:, num_fg:c1, :]                          # (bn, 1,   Qp)

    max_fg = jnp.max(logits_fg, axis=1, keepdims=True)    # (bn, 1, Qp)
    m = jnp.maximum(max_fg, bg)                           # max over ALL classes
    denom = jnp.sum(jnp.exp(logits - m), axis=1, keepdims=True)
    inv_denom = pl.reciprocal(denom, approx=False)        # exact (1e-5 tol)
    score = jnp.exp(max_fg - m) * inv_denom               # max fg softmax prob

    # first-max class index (matches torch/jnp argmax tie-breaking); the
    # equality against max_fg is exact because both come from the same tensor.
    cls = jax.lax.broadcasted_iota(jnp.int32, logits_fg.shape, 1)
    label = jnp.min(jnp.where(logits_fg == max_fg, cls, num_fg),
                    axis=1, keepdims=True)
    # NOTE: class id round-trips through f32 (exact for ids < 2^24).
    label_f = label.astype(jnp.float32)

    # --- verb scores: sigmoid(verb_logits) * obj_score (sublane broadcast).
    verbs = jax.nn.sigmoid(slab_ref[:, off_vl:off_vl + v, :]) * score

    # --- boxes: cxcywh -> xyxy scaled by [img_w, img_h] (2-row chunks).
    scale2 = slab_ref[:, off_wh:off_wh + 2, :]            # (bn, 2, Qp) = [w, h]
    sub = slab_ref[:, off_sb:off_sb + 4, :]               # (bn, 4, Qp)
    obj = slab_ref[:, off_ob:off_ob + 4, :]
    sub_lo = (sub[:, 0:2, :] - 0.5 * sub[:, 2:4, :]) * scale2   # [x0, y0]
    sub_hi = (sub[:, 0:2, :] + 0.5 * sub[:, 2:4, :]) * scale2   # [x1, y1]
    obj_lo = (obj[:, 0:2, :] - 0.5 * obj[:, 2:4, :]) * scale2
    obj_hi = (obj[:, 0:2, :] + 0.5 * obj[:, 2:4, :]) * scale2

    # --- lane-dense packed output: plain row stores at sublane offsets.
    packed_ref[:, 0:1, :] = score
    packed_ref[:, 1:2, :] = label_f
    packed_ref[:, 2:4, :] = sub_lo
    packed_ref[:, 4:6, :] = sub_hi
    packed_ref[:, 6:8, :] = obj_lo
    packed_ref[:, 8:10, :] = obj_hi
    packed_ref[:, 10:10 + v, :] = verbs


@jax.jit
def hoi_postprocess_core(obj_logits, verb_logits, sub_boxes, obj_boxes,
                         target_sizes):
    """Batched HOI post-processing.

    obj_logits  : (N, Q, C+1) f32
    verb_logits : (N, Q, V)   f32
    sub_boxes   : (N, Q, 4)   f32  (cx, cy, w, h), normalized
    obj_boxes   : (N, Q, 4)   f32
    target_sizes: (N, 2)      f32  (img_h, img_w)
    """
    n, q, c1 = obj_logits.shape
    v = verb_logits.shape[-1]

    qp = ((q + 127) // 128) * 128       # queries on the lane axis (128-dense)
    f_tot = c1 + v + 4 + 4 + 2          # merged input slab rows (sublane axis)
    p_tot = 10 + v                      # packed output rows

    def to_slab(x):                     # (N, Q, f) -> (N, f, Qp)
        xt = jnp.swapaxes(x.astype(jnp.float32), 1, 2)
        return jnp.pad(xt, ((0, 0), (0, 0), (0, qp - q)))

    img_h = target_sizes[:, 0].astype(jnp.float32)
    img_w = target_sizes[:, 1].astype(jnp.float32)
    wh_rows = jnp.broadcast_to(jnp.stack([img_w, img_h], axis=1)[:, :, None],
                               (n, 2, qp))

    slab = jnp.concatenate(
        [to_slab(obj_logits), to_slab(verb_logits),
         to_slab(sub_boxes), to_slab(obj_boxes), wh_rows], axis=1)   # (N,F,Qp)

    # --- images per grid step: VMEM-budget-derived, aiming for >= ~8 steps.
    per_img_bytes = (f_tot + p_tot) * qp * 4
    bn_budget = max(1, _BLOCK_BUDGET // (2 * per_img_bytes))   # double-buffered
    bn_steps = max(1, pl.cdiv(n, 8))
    bn = max(1, min(bn_budget, bn_steps))
    num_steps = pl.cdiv(n, bn)
    n_pad = num_steps * bn - n
    if n_pad:
        slab = jnp.pad(slab, ((0, n_pad), (0, 0), (0, 0)))
    n_tot = n + n_pad

    # Explicit scoped-VMEM limit: double-buffered blocks + temporaries + slack.
    vmem_limit = int(min(32 << 20,
                         max(8 << 20, 4 * bn * per_img_bytes + (2 << 20))))

    grid_spec = pltpu.PrefetchScalarGridSpec(
        num_scalar_prefetch=0,
        grid=(num_steps,),
        in_specs=[pl.BlockSpec((bn, f_tot, qp), lambda i: (i, 0, 0))],
        out_specs=pl.BlockSpec((bn, p_tot, qp), lambda i: (i, 0, 0)),
    )

    packed = pl.pallas_call(
        functools.partial(_hoi_kernel, num_fg=c1 - 1, num_verbs=v),
        grid_spec=grid_spec,
        out_shape=jax.ShapeDtypeStruct((n_tot, p_tot, qp), jnp.float32),
        compiler_params=pltpu.CompilerParams(
            dimension_semantics=("parallel",),
            vmem_limit_bytes=vmem_limit),
    )(slab)

    # Drop batch / lane padding, restore the (N, Q, ...) layout (plumbing).
    packed = packed[:n, :, :q]
    obj_scores = packed[:, 0, :]                               # (N, Q)
    obj_labels = packed[:, 1, :].astype(jnp.int32)             # (N, Q)
    sub_xyxy = jnp.swapaxes(packed[:, 2:6, :], 1, 2)           # (N, Q, 4)
    obj_xyxy = jnp.swapaxes(packed[:, 6:10, :], 1, 2)          # (N, Q, 4)
    verb_scores = jnp.swapaxes(packed[:, 10:10 + v, :], 1, 2)  # (N, Q, V) * score
    return obj_scores, obj_labels, verb_scores, sub_xyxy, obj_xyxy


def post_process_hoi(outputs, target_sizes, subject_category_id,
                     binary=False, aux_outputs=False):
    """JAX/Pallas equivalent of PostProcessHOI.forward (binary=False, aux=False)."""
    # TODO(synk): `binary` and `aux_outputs` branches repeat the same math on
    # extra heads/decoder layers; only the default (False/False) path is wired.
    obj_scores, obj_labels, verb_scores, sub_boxes, obj_boxes = jax.device_get(
        hoi_postprocess_core(
            outputs['pred_obj_logits'], outputs['pred_verb_logits'],
            outputs['pred_sub_boxes'], outputs['pred_obj_boxes'], target_sizes))

    n, q = obj_scores.shape
    sub_labels = np.full_like(obj_labels, subject_category_id)
    labels_all = np.concatenate([sub_labels, obj_labels], axis=1)   # (N, 2Q)
    boxes_all = np.concatenate([sub_boxes, obj_boxes], axis=1)      # (N, 2Q, 4)
    ids = np.arange(2 * q)
    sub_ids, obj_ids = ids[:q], ids[q:]

    results = []
    for idx in range(n):
        results.append({
            'labels': labels_all[idx],
            'boxes': boxes_all[idx],
            'verb_scores': verb_scores[idx],   # already multiplied by obj_scores
            'sub_ids': sub_ids,
            'obj_ids': obj_ids,
            'obj_scores': obj_scores[idx],
        })
    return results


def _reference(outputs, target_sizes):
    """Pure-JAX reference of the same forward, for a correctness check."""
    ol = outputs['pred_obj_logits']
    prob = jax.nn.softmax(ol, axis=-1)
    obj_scores = jnp.max(prob[..., :-1], axis=-1)
    obj_labels = jnp.argmax(prob[..., :-1], axis=-1)
    verb_scores = jax.nn.sigmoid(outputs['pred_verb_logits']) * obj_scores[..., None]
    img_h, img_w = target_sizes[:, 0], target_sizes[:, 1]
    scale = jnp.stack([img_w, img_h, img_w, img_h], axis=1)[:, None, :]

    def to_xyxy(b):
        cxcy, wh = b[..., :2], b[..., 2:]
        return jnp.concatenate([cxcy - 0.5 * wh, cxcy + 0.5 * wh], axis=-1)

    return (obj_scores, obj_labels, verb_scores,
            to_xyxy(outputs['pred_sub_boxes']) * scale,
            to_xyxy(outputs['pred_obj_boxes']) * scale)


if __name__ == "__main__":
    N, Q, C1, V = 2, 8, 9, 5        # batch, queries, obj classes (+ no-object), verbs
    SUBJECT_CATEGORY_ID = 0

    key = jax.random.PRNGKey(0)
    k1, k2, k3, k4 = jax.random.split(key, 4)
    outputs = {
        'pred_obj_logits': jax.random.normal(k1, (N, Q, C1), jnp.float32),
        'pred_verb_logits': jax.random.normal(k2, (N, Q, V), jnp.float32),
        'pred_sub_boxes': jax.random.uniform(k3, (N, Q, 4), jnp.float32,
                                             minval=0.1, maxval=0.5),
        'pred_obj_boxes': jax.random.uniform(k4, (N, Q, 4), jnp.float32,
                                             minval=0.1, maxval=0.5),
    }
    target_sizes = jnp.array([[480.0, 640.0], [512.0, 512.0]], jnp.float32)

    # run the kernel once and block on the result
    got_os, got_ol, got_vs, got_sb, got_ob = hoi_postprocess_core(
        outputs['pred_obj_logits'], outputs['pred_verb_logits'],
        outputs['pred_sub_boxes'], outputs['pred_obj_boxes'], target_sizes)
    jax.block_until_ready((got_os, got_ol, got_vs, got_sb, got_ob))

    # end-to-end per-image dict assembly (single device->host copy + numpy views)
    results = post_process_hoi(outputs, target_sizes, SUBJECT_CATEGORY_ID)
    assert len(results) == N

    # sanity check against pure-JAX reference
    ref_os, ref_ol, ref_vs, ref_sb, ref_ob = _reference(outputs, target_sizes)
    assert jnp.allclose(got_os, ref_os, atol=1e-5), "obj_scores mismatch"
    assert jnp.array_equal(got_ol, ref_ol.astype(jnp.int32)), "obj_labels mismatch"
    assert jnp.allclose(got_vs, ref_vs, atol=1e-5), "verb_scores mismatch"
    assert jnp.allclose(got_sb, ref_sb, atol=1e-4), "sub_boxes mismatch"
    assert jnp.allclose(got_ob, ref_ob, atol=1e-4), "obj_boxes mismatch"

    print("KERNEL_OK")
</pallas_src>

<mosaic_0001>
module attributes {stable_mosaic.version = 11 : i64} {
  func.func @_hoi_kernel(%arg0: i32, %arg1: memref<1x24x128xf32, #tpu.memory_space<vmem>>, %arg2: memref<1x15x128xf32, #tpu.memory_space<vmem>>) attributes {dimension_semantics = [#tpu.dimension_semantics<parallel>], iteration_bounds = array<i64: 2>, scalar_prefetch = 0 : i64, scratch_operands = 0 : i64, tpu.core_type = #tpu.core_type<tc>, window_params = [{transform_indices = @transform_0, window_bounds = array<i64: 1, 24, 128>}, {transform_indices = @transform_1, window_bounds = array<i64: 1, 15, 128>}]} {
    %c0 = arith.constant 0 : index
    %c0_0 = arith.constant 0 : index
    %c0_1 = arith.constant 0 : index
    %0 = vector.load %arg1[%c0, %c0_0, %c0_1] : memref<1x24x128xf32, #tpu.memory_space<vmem>>, vector<1x9x128xf32>
    %1 = vector.extract_strided_slice %0 {offsets = [0, 0, 0], sizes = [1, 8, 128], strides = [1, 1, 1]} : vector<1x9x128xf32> to vector<1x8x128xf32>
    %2 = vector.extract_strided_slice %0 {offsets = [0, 8, 0], sizes = [1, 1, 128], strides = [1, 1, 1]} : vector<1x9x128xf32> to vector<1x1x128xf32>
    %cst = arith.constant dense<0xFF800000> : vector<1x128xf32>
    %3 = vector.multi_reduction <maximumf>, %1, %cst [1] : vector<1x8x128xf32> to vector<1x128xf32>
    %4 = vector.shape_cast %3 : vector<1x128xf32> to vector<1x1x128xf32>
    %5 = arith.maximumf %4, %2 : vector<1x1x128xf32>
    %6 = vector.broadcast %5 : vector<1x1x128xf32> to vector<1x9x128xf32>
    %7 = arith.subf %0, %6 : vector<1x9x128xf32>
    %8 = math.exp %7 : vector<1x9x128xf32>
    %cst_2 = arith.constant dense<0.000000e+00> : vector<1x128xf32>
    %9 = vector.multi_reduction <add>, %8, %cst_2 [1] : vector<1x9x128xf32> to vector<1x128xf32>
    %10 = vector.shape_cast %9 : vector<1x128xf32> to vector<1x1x128xf32>
    %11 = tpu.reciprocal %10 : vector<1x1x128xf32> -> vector<1x1x128xf32>
    %12 = arith.subf %4, %5 : vector<1x1x128xf32>
    %13 = math.exp %12 : vector<1x1x128xf32>
    %14 = arith.mulf %13, %11 : vector<1x1x128xf32>
    %15 = tpu.iota {dimensions = array<i32: 1>} : vector<1x8x128xi32>
    %16 = vector.broadcast %4 : vector<1x1x128xf32> to vector<1x8x128xf32>
    %17 = arith.cmpf oeq, %1, %16 : vector<1x8x128xf32>
    %c8_i32 = arith.constant 8 : i32
    %18 = vector.broadcast %c8_i32 : i32 to vector<1x8x128xi32>
    %19 = arith.select %17, %15, %18 : vector<1x8x128xi1>, vector<1x8x128xi32>
    %cst_3 = arith.constant dense<2147483647> : vector<1x128xi32>
    %20 = vector.multi_reduction <minsi>, %19, %cst_3 [1] : vector<1x8x128xi32> to vector<1x128xi32>
    %21 = vector.shape_cast %20 : vector<1x128xi32> to vector<1x1x128xi32>
    %22 = arith.sitofp %21 : vector<1x1x128xi32> to vector<1x1x128xf32>
    %c0_4 = arith.constant 0 : index
    %c9 = arith.constant 9 : index
    %c0_5 = arith.constant 0 : index
    %23 = vector.load %arg1[%c0_4, %c9, %c0_5] : memref<1x24x128xf32, #tpu.memory_space<vmem>>, vector<1x5x128xf32>
    %24 = arith.negf %23 : vector<1x5x128xf32>
    %25 = math.exp %24 : vector<1x5x128xf32>
    %cst_6 = arith.constant 1.000000e+00 : f32
    %26 = vector.broadcast %cst_6 : f32 to vector<1x5x128xf32>
    %27 = arith.addf %26, %25 : vector<1x5x128xf32>
    %28 = arith.divf %26, %27 : vector<1x5x128xf32>
    %29 = vector.broadcast %14 : vector<1x1x128xf32> to vector<1x5x128xf32>
    %30 = arith.mulf %28, %29 : vector<1x5x128xf32>
    %c0_7 = arith.constant 0 : index
    %c22 = arith.constant 22 : index
    %c0_8 = arith.constant 0 : index
    %31 = vector.load %arg1[%c0_7, %c22, %c0_8] : memref<1x24x128xf32, #tpu.memory_space<vmem>>, vector<1x2x128xf32>
    %c0_9 = arith.constant 0 : index
    %c14 = arith.constant 14 : index
    %c0_10 = arith.constant 0 : index
    %32 = vector.load %arg1[%c0_9, %c14, %c0_10] : memref<1x24x128xf32, #tpu.memory_space<vmem>>, vector<1x4x128xf32>
    %c0_11 = arith.constant 0 : index
    %c18 = arith.constant 18 : index
    %c0_12 = arith.constant 0 : index
    %33 = vector.load %arg1[%c0_11, %c18, %c0_12] : memref<1x24x128xf32, #tpu.memory_space<vmem>>, vector<1x4x128xf32>
    %34 = vector.extract_strided_slice %32 {offsets = [0, 0, 0], sizes = [1, 2, 128], strides = [1, 1, 1]} : vector<1x4x128xf32> to vector<1x2x128xf32>
    %35 = vector.extract_strided_slice %32 {offsets = [0, 2, 0], sizes = [1, 2, 128], strides = [1, 1, 1]} : vector<1x4x128xf32> to vector<1x2x128xf32>
    %cst_13 = arith.constant 5.000000e-01 : f32
    %36 = vector.broadcast %cst_13 : f32 to vector<1x2x128xf32>
    %37 = arith.mulf %36, %35 : vector<1x2x128xf32>
    %38 = arith.subf %34, %37 : vector<1x2x128xf32>
    %39 = arith.mulf %38, %31 : vector<1x2x128xf32>
    %40 = vector.extract_strided_slice %32 {offsets = [0, 0, 0], sizes = [1, 2, 128], strides = [1, 1, 1]} : vector<1x4x128xf32> to vector<1x2x128xf32>
    %41 = vector.extract_strided_slice %32 {offsets = [0, 2, 0], sizes = [1, 2, 128], strides = [1, 1, 1]} : vector<1x4x128xf32> to vector<1x2x128xf32>
    %cst_14 = arith.constant 5.000000e-01 : f32
    %42 = vector.broadcast %cst_14 : f32 to vector<1x2x128xf32>
    %43 = arith.mulf %42, %41 : vector<1x2x128xf32>
    %44 = arith.addf %40, %43 : vector<1x2x128xf32>
    %45 = arith.mulf %44, %31 : vector<1x2x128xf32>
    %46 = vector.extract_strided_slice %33 {offsets = [0, 0, 0], sizes = [1, 2, 128], strides = [1, 1, 1]} : vector<1x4x128xf32> to vector<1x2x128xf32>
    %47 = vector.extract_strided_slice %33 {offsets = [0, 2, 0], sizes = [1, 2, 128], strides = [1, 1, 1]} : vector<1x4x128xf32> to vector<1x2x128xf32>
    %cst_15 = arith.constant 5.000000e-01 : f32
    %48 = vector.broadcast %cst_15 : f32 to vector<1x2x128xf32>
    %49 = arith.mulf %48, %47 : vector<1x2x128xf32>
    %50 = arith.subf %46, %49 : vector<1x2x128xf32>
    %51 = arith.mulf %50, %31 : vector<1x2x128xf32>
    %52 = vector.extract_strided_slice %33 {offsets = [0, 0, 0], sizes = [1, 2, 128], strides = [1, 1, 1]} : vector<1x4x128xf32> to vector<1x2x128xf32>
    %53 = vector.extract_strided_slice %33 {offsets = [0, 2, 0], sizes = [1, 2, 128], strides = [1, 1, 1]} : vector<1x4x128xf32> to vector<1x2x128xf32>
    %cst_16 = arith.constant 5.000000e-01 : f32
    %54 = vector.broadcast %cst_16 : f32 to vector<1x2x128xf32>
    %55 = arith.mulf %54, %53 : vector<1x2x128xf32>
    %56 = arith.addf %52, %55 : vector<1x2x128xf32>
    %57 = arith.mulf %56, %31 : vector<1x2x128xf32>
    %c0_17 = arith.constant 0 : index
    %c0_18 = arith.constant 0 : index
    %c0_19 = arith.constant 0 : index
    %58 = vector.load %arg2[%c0_17, %c0_18, %c0_19] : memref<1x15x128xf32, #tpu.memory_space<vmem>>, vector<1x1x128xf32>
    tpu.vector_store %arg2[%c0_17, %c0_18, %c0_19], %14 {strides = array<i32>} : memref<1x15x128xf32, #tpu.memory_space<vmem>>, vector<1x1x128xf32>,
    %c0_20 = arith.constant 0 : index
    %c1 = arith.constant 1 : index
    %c0_21 = arith.constant 0 : index
    %59 = vector.load %arg2[%c0_20, %c1, %c0_21] : memref<1x15x128xf32, #tpu.memory_space<vmem>>, vector<1x1x128xf32>
    tpu.vector_store %arg2[%c0_20, %c1, %c0_21], %22 {strides = array<i32>} : memref<1x15x128xf32, #tpu.memory_space<vmem>>, vector<1x1x128xf32>,
    %c0_22 = arith.constant 0 : index
    %c2 = arith.constant 2 : index
    %c0_23 = arith.constant 0 : index
    %60 = vector.load %arg2[%c0_22, %c2, %c0_23] : memref<1x15x128xf32, #tpu.memory_space<vmem>>, vector<1x2x128xf32>
    tpu.vector_store %arg2[%c0_22, %c2, %c0_23], %39 {strides = array<i32>} : memref<1x15x128xf32, #tpu.memory_space<vmem>>, vector<1x2x128xf32>,
    %c0_24 = arith.constant 0 : index
    %c4 = arith.constant 4 : index
    %c0_25 = arith.constant 0 : index
    %61 = vector.load %arg2[%c0_24, %c4, %c0_25] : memref<1x15x128xf32, #tpu.memory_space<vmem>>, vector<1x2x128xf32>
    tpu.vector_store %arg2[%c0_24, %c4, %c0_25], %45 {strides = array<i32>} : memref<1x15x128xf32, #tpu.memory_space<vmem>>, vector<1x2x128xf32>,
    %c0_26 = arith.constant 0 : index
    %c6 = arith.constant 6 : index
    %c0_27 = arith.constant 0 : index
    %62 = vector.load %arg2[%c0_26, %c6, %c0_27] : memref<1x15x128xf32, #tpu.memory_space<vmem>>, vector<1x2x128xf32>
    tpu.vector_store %arg2[%c0_26, %c6, %c0_27], %51 {strides = array<i32>} : memref<1x15x128xf32, #tpu.memory_space<vmem>>, vector<1x2x128xf32>,
    %c0_28 = arith.constant 0 : index
    %c8 = arith.constant 8 : index
    %c0_29 = arith.constant 0 : index
    %63 = vector.load %arg2[%c0_28, %c8, %c0_29] : memref<1x15x128xf32, #tpu.memory_space<vmem>>, vector<1x2x128xf32>
    tpu.vector_store %arg2[%c0_28, %c8, %c0_29], %57 {strides = array<i32>} : memref<1x15x128xf32, #tpu.memory_space<vmem>>, vector<1x2x128xf32>,
    %c0_30 = arith.constant 0 : index
    %c10 = arith.constant 10 : index
    %c0_31 = arith.constant 0 : index
    %64 = vector.load %arg2[%c0_30, %c10, %c0_31] : memref<1x15x128xf32, #tpu.memory_space<vmem>>, vector<1x5x128xf32>
    tpu.vector_store %arg2[%c0_30, %c10, %c0_31], %30 {strides = array<i32>} : memref<1x15x128xf32, #tpu.memory_space<vmem>>, vector<1x5x128xf32>,
    return
  }
  func.func @transform_0(%arg0: i32) -> (i32, i32, i32) {
    %c0_i32 = arith.constant 0 : i32
    %c0_i32_0 = arith.constant 0 : i32
    %c0_i32_1 = arith.constant 0 : i32
    return %arg0, %c0_i32, %c0_i32_0 : i32, i32, i32
  }
  func.func @transform_1(%arg0: i32) -> (i32, i32, i32) {
    %c0_i32 = arith.constant 0 : i32
    %c0_i32_0 = arith.constant 0 : i32
    %c0_i32_1 = arith.constant 0 : i32
    return %arg0, %c0_i32, %c0_i32_0 : i32, i32, i32
  }
}

</mosaic_0001>

<llo_original>
// kernel: hoi_postprocess_core.1
$region0: #{hoi_postprocess_core.1}
  #allocation0 [shape = 'u32[]', space=smem, size = 0x4, offset = 0x4, fixed_abs, tag = 'smem constant byte address 0x4 - core index']
  #allocation1 [shape = 'u32[144,128]{1,0:T(1,128)}', space=vmem, size = 0x12000, scoped, tag = 'internal scratch']
  %s0 = inlined_call_operand.vmem [shape: f32[2,24,128], index: 0, kind: input, shape index: {}]
  %s1 = inlined_call_operand.vmem [shape: f32[2,15,128], index: 1, kind: output, shape index: {}]
  %s2 = sld [smem:[#allocation0]]
  $region37: #{hoi_postprocess_core.1} parent=0
    _
  %s4 = ssub.s32 1, %s2
  %s5 = scalar_select 0, %s4, %s2
  loop: start=0, step=1, limit=4
  $region2: #{hoi_postprocess_core.1} parent=0 // loop_pre_header
    _
  $region3: #{hoi_postprocess_core.1} parent=0 // loop_header
    %s7 = sphi 0, %s11
    %p8 = scmp.ge.s32.totalorder %s7, 4
    %s17 = sphi 0, %s19
    %s20 = sphi 0, %s17
    %s21 = sphi 0, %s20
    %s37 = sphi 0, %s21
    %s43 = sphi 0, %s45
    %s46 = sphi 0, %s43
    %s47 = sphi 0, %s46
    %s63 = sphi 0, %s47
  $region4: #{hoi_postprocess_core.1} parent=0 // loop_header_branch
    %10 = sbr.rel (%p8) target = $region8
  $region5: #{hoi_postprocess_core.1} parent=0 // loop_body
    %s12 = ssub.s32 %s7, 1
    %s13 = ssub.s32 %s7, 2
    %s14 = sadd.s32 %s7, 1
    %s15 = ssub.s32 %s7, %s14
    %p16 = scmp.eq.s32.totalorder %s15, 0
    %s18 = sadd.s32 %s17, 1
    %s19 = scalar_select %p16, %s17, %s18
    %p22 = pneg %p16
    %p23 = scmp.eq.s32.totalorder %s7, 1
    %p24 = por %p22, %p23
    %p25 = scmp.ne.s32.totalorder %s17, %s20
    %p26 = scmp.eq.s32.totalorder %s7, 0
    %p27 = por %p25, %p26
    %p28 = scmp.ne.s32.totalorder %s17, %s20
    %p29 = scmp.eq.s32.totalorder %s12, 1
    %p30 = por %p28, %p29
    %p31 = scmp.ne.s32.totalorder %s20, %s21
    %p32 = scmp.eq.s32.totalorder %s12, 0
    %p33 = por %p31, %p32
    %p34 = scmp.ne.s32.totalorder %s20, %s21
    %p35 = scmp.eq.s32.totalorder %s13, 1
    %p36 = por %p34, %p35
    %p38 = scmp.ne.s32.totalorder %s21, %s37
    %p39 = scmp.eq.s32.totalorder %s13, 0
    %p40 = por %p38, %p39
    %s41 = ssub.s32 %s7, %s14
    %p42 = scmp.eq.s32.totalorder %s41, 0
    %s44 = sadd.s32 %s43, 1
    %s45 = scalar_select %p42, %s43, %s44
    %p48 = pneg %p42
    %p49 = scmp.eq.s32.totalorder %s7, 1
    %p50 = por %p48, %p49
    %p51 = scmp.ne.s32.totalorder %s43, %s46
    %p52 = scmp.eq.s32.totalorder %s7, 0
    %p53 = por %p51, %p52
    %p54 = scmp.ne.s32.totalorder %s43, %s46
    %p55 = scmp.eq.s32.totalorder %s12, 1
    %p56 = por %p54, %p55
    %p57 = scmp.ne.s32.totalorder %s46, %s47
    %p58 = scmp.eq.s32.totalorder %s12, 0
    %p59 = por %p57, %p58
    %p60 = scmp.ne.s32.totalorder %s46, %s47
    %p61 = scmp.eq.s32.totalorder %s13, 1
    %p62 = por %p60, %p61
    %p64 = scmp.ne.s32.totalorder %s47, %s63
    %p65 = scmp.eq.s32.totalorder %s13, 0
    %p66 = por %p64, %p65
    %p67 = scmp.le.s32.totalorder 1, %s7
    %p68 = scmp.lt.s32.totalorder %s7, 3
    %p69 = pnand %p67, %p68
    %p70 = pneg %p69
    // Predicated region
    $region9: #{hoi_postprocess_core.1} parent=5 // pred_check
      _
    $region10: #{hoi_postprocess_core.1} parent=5 // pred_check_branch
      %72 = sbr.rel (%p69) target = $region12
    $region11: #{hoi_postprocess_core.1} parent=5 // pred_region
      %s73 = ssub.s32 %s7, 1
    $region12: #{hoi_postprocess_core.1} parent=5 // pred_fallthru
      _
    %p74 = scmp.lt.s32.totalorder %s7, 2
    // Predicated region
    $region13: #{hoi_postprocess_core.1} parent=5 // pred_check
      %p75 = pneg %p74
    $region14: #{hoi_postprocess_core.1} parent=5 // pred_check_branch
      %77 = sbr.rel (%p75) target = $region16
    $region15: #{hoi_postprocess_core.1} parent=5 // pred_region
      // Predicated region
      $region17: #{hoi_postprocess_core.1} parent=15 // pred_check
        %p78 = pneg %p27
      $region18: #{hoi_postprocess_core.1} parent=15 // pred_check_branch
        %80 = sbr.rel (%p78) target = $region20
      $region19: #{hoi_postprocess_core.1} parent=15 // pred_region
        %p81 = scmp.lt.s32.totalorder %s7, 1
        %s82 = scalar_select %p81, %s7, 1
        %s83 = smul.addr %s82, 3
        %s84 = smul.addr %s83, 8
        %s85 = scalar_lea.vmem %s0, %s84
      $region20: #{hoi_postprocess_core.1} parent=15 // pred_fallthru
        _
    $region16: #{hoi_postprocess_core.1} parent=5 // pred_fallthru
      _
    %p86 = scmp.le.s32.totalorder 1, %s7
    %p87 = scmp.lt.s32.totalorder %s7, 3
    %p88 = pnand %p86, %p87
    %p89 = pneg %p88
    // Predicated region
    $region21: #{hoi_postprocess_core.1} parent=5 // pred_check
      _
    $region22: #{hoi_postprocess_core.1} parent=5 // pred_check_branch
      %91 = sbr.rel (%p88) target = $region24
    $region23: #{hoi_postprocess_core.1} parent=5 // pred_region
      %s92 = ssub.s32 %s7, 1
      %p93 = scmp.lt.s32.totalorder %s12, 1
      %s94 = scalar_select %p93, %s12, 1
      %s95 = smul.addr %s94, 3
      %s96 = smul.addr %s95, 8
      %s97 = scalar_lea.vmem %s0, %s96
      %p98 = pneg %p33
      %p99 = pneg %p30
      %p100 = pneg %p59
      %p101 = pneg %p56
      %p102 = scmp.lt.s32.totalorder %s12, 1
      %s103 = scalar_select %p102, %s12, 1
      %s104 = smul.addr %s103, 2
      %s105 = smul.addr %s104, 8
      %s106 = scalar_lea.vmem %s1, %s105
      %p107 = scmp.lt.s32.totalorder %s12, 1
      %s108 = scalar_select %p107, %s12, 1
      %s109 = smul.addr %s108, 3
      %s110 = smul.addr %s109, 8
      %s111 = scalar_lea.vmem %s0, %s110
      %p112 = scmp.lt.s32.totalorder %s12, 1
      %s113 = scalar_select %p112, %s12, 1
      %s114 = smul.addr %s113, 2
      %s115 = smul.addr %s114, 8
      %s116 = scalar_lea.vmem %s1, %s115
      %v117 = vld [vmem:[%s111] sm:$0xff]
      %v118 = vld [vmem:[%s111 + $0x8] sm:$0x1]
      %v119 = vrot.slane %v117, 4
      %v120 = vmax.f32 %v117, %v119
      %v121 = vrot.slane %v120, 2
      %v122 = vmax.f32 %v120, %v121
      %v123 = vrot.slane %v122, 1
      %v124 = vmax.f32 %v122, %v123
      %v125 = vmax.f32 %v124, %v118
      %v126 = vlaneseq
      %v127 = vshrl.u32 %v126, 7
      %v128 = vsub.s32 0, %v127
      %v129 = vrot.slane %v125, %v128
      %v130 = vsub.f32 %v117, %v129
      %v131 = vsub.f32 %v118, %v129
      %v132 = vmul.f32 %v130, 1.442695
      %v133 = vpow.pop %v132
      %v134 = vmul.f32 %v131, 1.442695
      %v135 = vpow.pop %v134
      %vm136 = vcmask 1040384
      %v137 = vsel %vm136, %v135, 0.0
      %v138 = vadd.f32 %v133, %v137
      %v139 = vrot.slane %v138, 4
      %v140 = vadd.f32 %v138, %v139
      %v141 = vrot.slane %v140, 2
      %v142 = vadd.f32 %v140, %v141
      %v143 = vrot.slane %v142, 1
      %v144 = vadd.f32 %v142, %v143
      %v145 = vrcp.pop %v144
      %v146 = vsub.f32 %v124, %v125
      %v147 = vmul.f32 %v146, 1.442695
      %v148 = vpow.pop %v147
      %v149 = vmul.f32 %v148, %v145
      %v150 = vlaneseq
      %v151 = vshrl.u32 %v150, 7
      %vm152 = vcmp.eq.f32.partialorder %v117, %v124
      %v153 = vsel %vm152, %v151, 8
      %v154 = vrot.slane %v153, 4
      %vm155 = vcmp.lt.s32.totalorder %v153, %v154
      %v156 = vsel %vm155, %v153, %v154
      %v157 = vrot.slane %v156, 2
      %vm158 = vcmp.lt.s32.totalorder %v156, %v157
      %v159 = vsel %vm158, %v156, %v157
      %v160 = vrot.slane %v159, 1
      %vm161 = vcmp.lt.s32.totalorder %v159, %v160
      %v162 = vsel %vm161, %v159, %v160
      %v163 = vcvt.s32.f32 %v162
      %v164 = vld [vmem:[%s111 + $0x9] sm:$0x1f]
      %v165 = vxor.u32 %v164, 2147483648
      %v166 = vmul.f32 %v165, 1.442695
      %v167 = vpow.pop %v166
      %v168 = vadd.f32 %v167, 1.0
      %v169 = vrcp.pop %v168
      %v170 = vmul.f32 1.0, %v169
      %v171 = vlaneseq
      %v172 = vshrl.u32 %v171, 7
      %v173 = vsub.s32 0, %v172
      %v174 = vrot.slane %v149, %v173
      %v175 = vmul.f32 %v170, %v174
      %v176 = vld [vmem:[%s111 + $0x16] sm:$0x3]
      %v177 = vld [vmem:[%s111 + $0xe] sm:$0xf]
      %v178 = vld [vmem:[%s111 + $0x12] sm:$0xf]
      %v179 = vmul.f32 %v177, 0.5
      %v181 = vrot.slane %v179, 2
      %v183 = vsub.f32 %v177, %v181
      %v184 = vmul.f32 %v183, %v176
      %v185 = vadd.f32 %v177, %v181
      %v186 = vmul.f32 %v185, %v176
      %v187 = vmul.f32 %v178, 0.5
      %v189 = vrot.slane %v187, 2
      %v191 = vsub.f32 %v178, %v189
      %v192 = vmul.f32 %v191, %v176
      %v193 = vadd.f32 %v178, %v189
      %v194 = vmul.f32 %v193, %v176
      %195 = vst [vmem:[%s116] sm:$0x1] %v149
      %196 = vst [vmem:[%s116 + $0x1] sm:$0x1] %v163
      %197 = vst [vmem:[%s116 + $0x2] sm:$0x3] %v184
      %198 = vst [vmem:[%s116 + $0x4] sm:$0x3] %v186
      %199 = vst [vmem:[%s116 + $0x6] sm:$0x3] %v192
      %200 = vst [vmem:[%s116 + $0x8] sm:$0x3] %v194
      %201 = vst [vmem:[%s116 + $0xa] sm:$0x1f] %v175
      %p202 = scmp.lt.s32.totalorder %s12, 1
      %s203 = scalar_select %p202, %s12, 1
      %s204 = smul.addr %s203, 2
      %s205 = smul.addr %s204, 8
      %s206 = scalar_lea.vmem %s1, %s205
      // Predicated region
      $region25: #{hoi_postprocess_core.1} parent=23 // pred_check
        %p207 = pneg %p56
      $region26: #{hoi_postprocess_core.1} parent=23 // pred_check_branch
        %209 = sbr.rel (%p207) target = $region28
      $region27: #{hoi_postprocess_core.1} parent=23 // pred_region
        _
      $region28: #{hoi_postprocess_core.1} parent=23 // pred_fallthru
        _
    $region24: #{hoi_postprocess_core.1} parent=5 // pred_fallthru
      _
    %p210 = scmp.le.s32.totalorder 2, %s7
    // Predicated region
    $region29: #{hoi_postprocess_core.1} parent=5 // pred_check
      %p211 = pneg %p210
    $region30: #{hoi_postprocess_core.1} parent=5 // pred_check_branch
      %213 = sbr.rel (%p211) target = $region32
    $region31: #{hoi_postprocess_core.1} parent=5 // pred_region
      %s214 = ssub.s32 %s7, 2
      // Predicated region
      $region33: #{hoi_postprocess_core.1} parent=31 // pred_check
        %p215 = pneg %p62
      $region34: #{hoi_postprocess_core.1} parent=31 // pred_check_branch
        %217 = sbr.rel (%p215) target = $region36
      $region35: #{hoi_postprocess_core.1} parent=31 // pred_region
        %p218 = scmp.lt.s32.totalorder %s13, 1
        %s219 = scalar_select %p218, %s13, 1
        %s220 = smul.addr %s219, 2
        %s221 = smul.addr %s220, 8
        %s222 = scalar_lea.vmem %s1, %s221
      $region36: #{hoi_postprocess_core.1} parent=31 // pred_fallthru
        _
    $region32: #{hoi_postprocess_core.1} parent=5 // pred_fallthru
      _
  $region6: #{hoi_postprocess_core.1} parent=0 // loop_footer
    %s11 = sadd.s32 1, %s7
  $region7: #{hoi_postprocess_core.1} parent=0 // loop_footer_branch
    %6 = sbr.rel target = $region3
  $region8: #{hoi_postprocess_core.1} parent=0 // loop_exit
    _

</llo_original>
